<compile_context>
chip_gen: v6e
topology: v6e:2x2x1
jax: 0.10.0
libtpu: 0.0.40
codegen_flags: <defaults>
</compile_context>

<pallas_src>
import functools

import jax
import jax.numpy as jnp
import numpy as np
from jax import lax
from jax.experimental import pallas as pl
from jax.experimental.pallas import tpu as pltpu

_BN_EPS = 1e-5


# ----------------------------------------------------------------------------
# Pallas kernel: the whole inverted-residual block, fused.
# Block layout: x_ref (Bn, Cin, TM), weights full, o_ref (Bn, Cout, TM).
# Lane m of a block encodes a spatial position with w = m % conv_w (blocks are
# W-aligned by construction).
# ----------------------------------------------------------------------------
def _qinv_res_kernel(x_ref, w1_ref, b1_ref, wd_ref, b2_ref, w3_ref, b3_ref,
                     o_ref, *, conv_w, use_res, batch_block):
    mxu_dtype = w1_ref.dtype
    TM = x_ref.shape[-1]
    Hd, K = wd_ref.shape
    P = (K - 1) // 2

    # ---- hoisted, batch-invariant data -------------------------------------
    # Per-lane w position at shape (1, TM): 1/Hd the iota/mod/compare VALU work
    # of the old (Hd, TM) version; broadcast happens inside jnp.where.
    wpos = lax.broadcasted_iota(jnp.int32, (1, TM), 1) % conv_w
    wd = wd_ref[...].astype(jnp.float32)                     # (Hd, K), tiny
    w_ctr = wd[:, P:P + 1]                                   # centre tap
    taps = []
    for k in range(K):
        d = k - P
        if d == 0:
            continue
        valid = (wpos < conv_w - d) if d > 0 else (wpos >= -d)   # (1, TM)
        taps.append((d, valid, wd[:, k:k + 1]))
    w1 = w1_ref[...]                                         # (Hd, Cin) mxu_dtype
    w3 = w3_ref[...]                                         # (Cout, Hd) mxu_dtype
    b1 = b1_ref[...]                                         # (Hd, 1) f32
    b2 = b2_ref[...]
    b3 = b3_ref[...]

    # ---- per-image pipeline (pl.loop bounds live ranges of intermediates) --
    @pl.loop(0, batch_block)
    def _(b):
        x = x_ref[b].astype(jnp.float32)                     # (Cin, TM)

        # 1) expand 1x1 conv + folded BN + ReLU : bf16 MXU, f32 accumulate
        h = jnp.dot(w1, x.astype(mxu_dtype),
                    preferred_element_type=jnp.float32)      # (Hd, TM)
        h = jnp.maximum(h + b1, 0.0)

        # 2) depthwise [1,K] conv along w: XLU rolls + masked multiply-adds.
        #    The (1,TM) mask implements the zero padding and kills any
        #    wrap-around / cross-row leakage inside the block.
        acc = h * w_ctr
        for d, valid, w_k in taps:
            shifted = pltpu.roll(h, shift=(-d) % TM, axis=1)  # shifted[m]=h[m+d]
            acc = acc + jnp.where(valid, shifted, 0.0) * w_k
        h2 = jnp.maximum(acc + b2, 0.0)

        # 3) project 1x1 conv + folded BN (no ReLU)
        y = jnp.dot(w3, h2.astype(mxu_dtype),
                    preferred_element_type=jnp.float32)      # (Cout, TM)
        y = y + b3
        if use_res:                                          # static Python flag
            y = y + x
        o_ref[b] = y.astype(o_ref.dtype)


# ----------------------------------------------------------------------------
# Tiling heuristic: VMEM-budgeted lane block TM, batch sub-block Bn, and an
# explicit vmem_limit_bytes.
# ----------------------------------------------------------------------------
def _choose_tiling(N, Cin, Cout, Hd, K, H, W, io_itemsize, *,
                   vmem_budget_bytes=24 << 20, step_target_bytes=512 << 10,
                   step_floor_bytes=128 << 10, min_grid_steps=4,
                   max_lane_block=32768):
    M = H * W

    # f32 intermediates live per lane for ONE image inside the pl.loop body
    # (x, h, roll/acc temporaries, h2, y) -- conservative 4*Hd factor.
    live_per_lane = 4 * (Cin + 4 * Hd + Cout)
    # double-buffered activation I/O per lane per image
    io_per_lane = 2 * (Cin + Cout) * io_itemsize
    w_bytes = 8 * (Hd * Cin + Hd * K + Cout * Hd + 2 * Hd + Cout)

    lane_cap = max(W, min(max_lane_block,
                          vmem_budget_bytes // (live_per_lane + io_per_lane)))

    # Candidate lane blocks: th*W dividing M (W-aligned blocks keep the
    # depthwise per-lane mask exact), largest first.
    cands = [th * W for th in range(H, 0, -1) if M % (th * W) == 0]
    aligned = [t for t in cands if t <= lane_cap and t % 128 == 0]
    anysz = [t for t in cands if t <= lane_cap]
    TM = aligned[0] if aligned else (anysz[0] if anysz else cands[-1])

    def vmem_bytes(bn, tm):
        return bn * io_per_lane * tm + live_per_lane * tm + w_bytes

    # Batch sub-block: grow until each grid step moves >= step_target_bytes of
    # activations (amortize ~0.35 us/step) or the VMEM budget is hit.
    Bn = 1
    for bn in range(1, N + 1):
        if N % bn:
            continue
        if vmem_bytes(bn, TM) > vmem_budget_bytes:
            break
        Bn = bn
        if bn * (Cin + Cout) * TM * io_itemsize >= step_target_bytes:
            break

    # Keep a few grid steps alive (DMA/compute overlap, v7x dual-TC sharding)
    # but never drop per-step traffic below the floor to do so.
    def steps(bn, tm):
        return (N // bn) * (M // tm)

    def step_bytes(bn, tm):
        return bn * (Cin + Cout) * tm * io_itemsize

    while steps(Bn, TM) < min_grid_steps:
        shrunk = False
        if Bn > 1:
            nb = max(b for b in range(1, Bn) if N % b == 0)
            if step_bytes(nb, TM) >= step_floor_bytes:
                Bn, shrunk = nb, True
        if not shrunk:
            smaller = ([t for t in cands if t < TM and t % 128 == 0]
                       or [t for t in cands if t < TM])
            if smaller and step_bytes(Bn, smaller[0]) >= step_floor_bytes:
                TM, shrunk = smaller[0], True
        if not shrunk:
            break

    vmem_limit = int(min(64 << 20, max(32 << 20, 2 * vmem_bytes(Bn, TM))))
    return TM, Bn, vmem_limit


# ----------------------------------------------------------------------------
# Wrapper: free reshape NCHW -> (N, C, H*W), pallas_call, free reshape back.
# HBM I/O dtype follows x's dtype (pass bf16 activations for half the bytes).
# ----------------------------------------------------------------------------
def qinverted_residual_pallas(x_nchw, folded, *, stride=1,
                              mxu_dtype=jnp.bfloat16):
    # TODO(synk): stride > 1 (no-residual) and expand_ratio == 1 (no expand
    # conv) variants of the block are not implemented in this fused kernel.
    if stride != 1:
        raise NotImplementedError("fused kernel implements the stride==1 path")

    w1 = folded["w1"].astype(mxu_dtype)          # (Hd, Cin)
    w3 = folded["w3"].astype(mxu_dtype)          # (Cout, Hd)
    b1, wd, b2, b3 = folded["b1"], folded["wd"], folded["b2"], folded["b3"]
    assert wd.shape[1] % 2 == 1, "depthwise kernel width must be odd"

    N, Cin, H, W = x_nchw.shape
    Hd, K = wd.shape
    Cout = w3.shape[0]
    use_res = (stride == 1 and Cin == Cout)

    M = H * W
    x3 = x_nchw.reshape(N, Cin, M)               # free merge of trailing dims

    io_itemsize = np.dtype(x_nchw.dtype).itemsize
    TM, Bn, vmem_limit = _choose_tiling(N, Cin, Cout, Hd, K, H, W, io_itemsize)
    grid = (N // Bn, M // TM)

    def full_spec(shape):
        nd = len(shape)
        return pl.BlockSpec(shape, lambda n, m, _nd=nd: (0,) * _nd)

    out3 = pl.pallas_call(
        functools.partial(_qinv_res_kernel, conv_w=W, use_res=use_res,
                          batch_block=Bn),
        out_shape=jax.ShapeDtypeStruct((N, Cout, M), x_nchw.dtype),
        grid=grid,
        in_specs=[
            pl.BlockSpec((Bn, Cin, TM), lambda n, m: (n, 0, m)),
            full_spec(w1.shape), full_spec(b1.shape), full_spec(wd.shape),
            full_spec(b2.shape), full_spec(w3.shape), full_spec(b3.shape),
        ],
        out_specs=pl.BlockSpec((Bn, Cout, TM), lambda n, m: (n, 0, m)),
        compiler_params=pltpu.CompilerParams(
            dimension_semantics=("parallel", "parallel"),
            vmem_limit_bytes=vmem_limit),
    )(x3, w1, b1, wd, b2, w3, b3)

    return out3.reshape(N, Cout, H, W)           # free split of trailing dim


# ----------------------------------------------------------------------------
# Deterministic parameter construction (PyTorch shapes) + BN folding
# ----------------------------------------------------------------------------
def make_params(key, n_in, n_out, expand_ratio, k_dw=5):
    hidden = int(round(n_in * expand_ratio))
    ks = jax.random.split(key, 15)

    def bn_params(kg, kb, km, kv, c):
        gamma = 0.5 + jax.random.uniform(kg, (c,), jnp.float32)
        beta = 0.1 * jax.random.normal(kb, (c,), jnp.float32)
        mean = 0.1 * jax.random.normal(km, (c,), jnp.float32)
        var = 0.5 + jax.random.uniform(kv, (c,), jnp.float32)
        return gamma, beta, mean, var

    raw = {
        # PyTorch conv weights: (hid,n_in,1,1) / (hid,1,1,K) / (n_out,hid,1,1)
        "w1": 0.3 * jax.random.normal(ks[0], (hidden, n_in), jnp.float32),
        "wd": 0.3 * jax.random.normal(ks[1], (hidden, k_dw), jnp.float32),
        "w3": 0.3 * jax.random.normal(ks[2], (n_out, hidden), jnp.float32),
        "bn1": bn_params(ks[3], ks[4], ks[5], ks[6], hidden),
        "bn2": bn_params(ks[7], ks[8], ks[9], ks[10], hidden),
        "bn3": bn_params(ks[11], ks[12], ks[13], ks[14], n_out),
    }

    def fold(gamma, beta, mean, var):
        scale = gamma / jnp.sqrt(var + _BN_EPS)
        return scale, beta - mean * scale

    s1, bias1 = fold(*raw["bn1"])
    s2, bias2 = fold(*raw["bn2"])
    s3, bias3 = fold(*raw["bn3"])

    folded = {
        "w1": raw["w1"] * s1[:, None],          # (Hd, Cin)
        "b1": bias1[:, None],                   # (Hd, 1)
        "wd": raw["wd"] * s2[:, None],          # (Hd, K)
        "b2": bias2[:, None],                   # (Hd, 1)
        "w3": raw["w3"] * s3[:, None],          # (Cout, Hd)
        "b3": bias3[:, None],                   # (Cout, 1)
    }
    return raw, folded


# ----------------------------------------------------------------------------
# Independent pure-JAX reference mirroring the PyTorch ops (eval-mode BN)
# ----------------------------------------------------------------------------
def ref_forward(x, raw, stride, use_res):
    def bn(y, gamma, beta, mean, var):
        sh = (1, -1, 1, 1)
        return ((y - mean.reshape(sh)) / jnp.sqrt(var + _BN_EPS).reshape(sh)
                * gamma.reshape(sh) + beta.reshape(sh))

    dn = ("NCHW", "OIHW", "NCHW")
    w1 = raw["w1"][:, :, None, None]
    h = lax.conv_general_dilated(x, w1, (1, 1), "VALID", dimension_numbers=dn)
    h = jnp.maximum(bn(h, *raw["bn1"]), 0.0)

    wd = raw["wd"][:, None, None, :]
    pad = (wd.shape[-1] - 1) // 2
    h = lax.conv_general_dilated(h, wd, (stride, stride),
                                 ((0, 0), (pad, pad)), dimension_numbers=dn,
                                 feature_group_count=wd.shape[0])
    h = jnp.maximum(bn(h, *raw["bn2"]), 0.0)

    w3 = raw["w3"][:, :, None, None]
    h = lax.conv_general_dilated(h, w3, (1, 1), "VALID", dimension_numbers=dn)
    h = bn(h, *raw["bn3"])
    return x + h if use_res else h


if __name__ == "__main__":
    key = jax.random.PRNGKey(0)
    kx, kp = jax.random.split(key)

    # QInvertedResidual(n_in=4, n_out=4, stride=1, expand_ratio=2) -> use_res
    N, Cin, H, W = 2, 4, 16, 16
    n_out, expand_ratio, stride = 4, 2, 1

    x = jax.random.normal(kx, (N, Cin, H, W), jnp.float32)
    raw, folded = make_params(kp, Cin, n_out, expand_ratio)
    ref = ref_forward(x, raw, stride, use_res=(stride == 1 and Cin == n_out))

    # Exact-path check (f32 MXU operands) against the pure-JAX reference.
    out_f32 = qinverted_residual_pallas(x, folded, stride=stride,
                                        mxu_dtype=jnp.float32)
    out_f32 = jax.block_until_ready(out_f32)
    np.testing.assert_allclose(np.asarray(out_f32), np.asarray(ref),
                               rtol=5e-3, atol=5e-3)

    # Production path: bf16 MXU operands (native MXU rate), f32 accumulation.
    out_bf16 = qinverted_residual_pallas(x, folded, stride=stride)
    out_bf16 = jax.block_until_ready(out_bf16)
    np.testing.assert_allclose(np.asarray(out_bf16), np.asarray(ref),
                               rtol=2e-2, atol=2e-2)

    print("KERNEL_OK")
</pallas_src>

<mosaic_0001>
module attributes {stable_mosaic.version = 11 : i64} {
  func.func @_qinv_res_kernel(%arg0: i32, %arg1: i32, %arg2: memref<2x4x256xf32, #tpu.memory_space<vmem>>, %arg3: memref<8x4xf32, #tpu.memory_space<vmem>>, %arg4: memref<8x1xf32, #tpu.memory_space<vmem>>, %arg5: memref<8x5xf32, #tpu.memory_space<vmem>>, %arg6: memref<8x1xf32, #tpu.memory_space<vmem>>, %arg7: memref<4x8xf32, #tpu.memory_space<vmem>>, %arg8: memref<4x1xf32, #tpu.memory_space<vmem>>, %arg9: memref<2x4x256xf32, #tpu.memory_space<vmem>>) attributes {dimension_semantics = [#tpu.dimension_semantics<parallel>, #tpu.dimension_semantics<parallel>], iteration_bounds = array<i64: 1, 1>, scalar_prefetch = 0 : i64, scratch_operands = 0 : i64, tpu.core_type = #tpu.core_type<tc>, window_params = [{transform_indices = @transform_0, window_bounds = array<i64: 2, 4, 256>}, {pipeline_mode = #tpu.pipeline_mode<synchronous>, transform_indices = @transform_1, window_bounds = array<i64: 8, 4>}, {pipeline_mode = #tpu.pipeline_mode<synchronous>, transform_indices = @transform_2, window_bounds = array<i64: 8, 1>}, {pipeline_mode = #tpu.pipeline_mode<synchronous>, transform_indices = @transform_3, window_bounds = array<i64: 8, 5>}, {pipeline_mode = #tpu.pipeline_mode<synchronous>, transform_indices = @transform_4, window_bounds = array<i64: 8, 1>}, {pipeline_mode = #tpu.pipeline_mode<synchronous>, transform_indices = @transform_5, window_bounds = array<i64: 4, 8>}, {pipeline_mode = #tpu.pipeline_mode<synchronous>, transform_indices = @transform_6, window_bounds = array<i64: 4, 1>}, {transform_indices = @transform_7, window_bounds = array<i64: 2, 4, 256>}]} {
    %0 = tpu.iota {dimensions = array<i32: 1>} : vector<1x256xi32>
    %c16_i32 = arith.constant 16 : i32
    %c0_i32 = arith.constant 0 : i32
    %1 = arith.cmpi eq, %c16_i32, %c0_i32 : i32
    %c1_i32 = arith.constant 1 : i32
    %2 = arith.select %1, %c1_i32, %c16_i32 : i32
    %3 = vector.broadcast %2 : i32 to vector<1x256xi32>
    %4 = arith.remsi %0, %3 : vector<1x256xi32>
    %c0_i32_0 = arith.constant 0 : i32
    %5 = vector.broadcast %c0_i32_0 : i32 to vector<1x256xi32>
    %6 = arith.cmpi ne, %4, %5 : vector<1x256xi32>
    %c0_i32_1 = arith.constant 0 : i32
    %7 = vector.broadcast %c0_i32_1 : i32 to vector<1x256xi32>
    %8 = arith.cmpi slt, %4, %7 : vector<1x256xi32>
    %c0_i32_2 = arith.constant 0 : i32
    %9 = arith.cmpi slt, %2, %c0_i32_2 : i32
    %10 = vector.broadcast %9 : i1 to vector<1x256xi1>
    %11 = vector.broadcast %10 : vector<1x256xi1> to vector<1x256xi1>
    %12 = arith.xori %8, %11 : vector<1x256xi1>
    %13 = arith.andi %12, %6 : vector<1x256xi1>
    %14 = vector.broadcast %2 : i32 to vector<1x256xi32>
    %15 = arith.addi %4, %14 : vector<1x256xi32>
    %16 = arith.select %13, %15, %4 : vector<1x256xi1>, vector<1x256xi32>
    %c0 = arith.constant 0 : index
    %c0_3 = arith.constant 0 : index
    %17 = vector.load %arg5[%c0, %c0_3] : memref<8x5xf32, #tpu.memory_space<vmem>>, vector<8x5xf32>
    %18 = vector.extract_strided_slice %17 {offsets = [0, 2], sizes = [8, 1], strides = [1, 1]} : vector<8x5xf32> to vector<8x1xf32>
    %c2_i32 = arith.constant 2 : i32
    %19 = vector.broadcast %c2_i32 : i32 to vector<1x256xi32>
    %20 = arith.cmpi sge, %16, %19 : vector<1x256xi32>
    %21 = vector.extract_strided_slice %17 {offsets = [0, 0], sizes = [8, 1], strides = [1, 1]} : vector<8x5xf32> to vector<8x1xf32>
    %c1_i32_4 = arith.constant 1 : i32
    %22 = vector.broadcast %c1_i32_4 : i32 to vector<1x256xi32>
    %23 = arith.cmpi sge, %16, %22 : vector<1x256xi32>
    %24 = vector.extract_strided_slice %17 {offsets = [0, 1], sizes = [8, 1], strides = [1, 1]} : vector<8x5xf32> to vector<8x1xf32>
    %c15_i32 = arith.constant 15 : i32
    %25 = vector.broadcast %c15_i32 : i32 to vector<1x256xi32>
    %26 = arith.cmpi slt, %16, %25 : vector<1x256xi32>
    %27 = vector.extract_strided_slice %17 {offsets = [0, 3], sizes = [8, 1], strides = [1, 1]} : vector<8x5xf32> to vector<8x1xf32>
    %c14_i32 = arith.constant 14 : i32
    %28 = vector.broadcast %c14_i32 : i32 to vector<1x256xi32>
    %29 = arith.cmpi slt, %16, %28 : vector<1x256xi32>
    %30 = vector.extract_strided_slice %17 {offsets = [0, 4], sizes = [8, 1], strides = [1, 1]} : vector<8x5xf32> to vector<8x1xf32>
    %c0_5 = arith.constant 0 : index
    %c0_6 = arith.constant 0 : index
    %31 = vector.load %arg3[%c0_5, %c0_6] : memref<8x4xf32, #tpu.memory_space<vmem>>, vector<8x4xf32>
    %c0_7 = arith.constant 0 : index
    %c0_8 = arith.constant 0 : index
    %32 = vector.load %arg7[%c0_7, %c0_8] : memref<4x8xf32, #tpu.memory_space<vmem>>, vector<4x8xf32>
    %c0_9 = arith.constant 0 : index
    %c0_10 = arith.constant 0 : index
    %33 = vector.load %arg4[%c0_9, %c0_10] : memref<8x1xf32, #tpu.memory_space<vmem>>, vector<8x1xf32>
    %c0_11 = arith.constant 0 : index
    %c0_12 = arith.constant 0 : index
    %34 = vector.load %arg6[%c0_11, %c0_12] : memref<8x1xf32, #tpu.memory_space<vmem>>, vector<8x1xf32>
    %c0_13 = arith.constant 0 : index
    %c0_14 = arith.constant 0 : index
    %35 = vector.load %arg8[%c0_13, %c0_14] : memref<4x1xf32, #tpu.memory_space<vmem>>, vector<4x1xf32>
    %c0_i32_15 = arith.constant 0 : i32
    %c2_i32_16 = arith.constant 2 : i32
    %36 = arith.addi %c0_i32_15, %c2_i32_16 : i32
    %c1_i32_17 = arith.constant 1 : i32
    scf.for %arg10 = %c0_i32_15 to %36 step %c1_i32_17  : i32 {
      %c1_i32_19 = arith.constant 1 : i32
      %37 = arith.muli %arg10, %c1_i32_19 : i32
      %c0_i32_20 = arith.constant 0 : i32
      %38 = arith.addi %c0_i32_20, %37 : i32
      %39 = arith.index_cast %38 : i32 to index
      %c0_21 = arith.constant 0 : index
      %c0_22 = arith.constant 0 : index
      %40 = vector.load %arg2[%39, %c0_21, %c0_22] : memref<2x4x256xf32, #tpu.memory_space<vmem>>, vector<1x4x256xf32>
      %41 = vector.shape_cast %40 : vector<1x4x256xf32> to vector<4x256xf32>
      %cst = arith.constant dense<0.000000e+00> : vector<8x256xf32>
      %42 = tpu.matmul %31, %41, %cst {dimension_numbers = #tpu.dot_dimension_numbers<[1], [0], [0], [1], [0, 0, 1, 1], [], []>} : vector<8x4xf32>, vector<4x256xf32>, vector<8x256xf32> -> vector<8x256xf32>
      %43 = vector.broadcast %33 : vector<8x1xf32> to vector<8x256xf32>
      %44 = arith.addf %42, %43 : vector<8x256xf32>
      %cst_23 = arith.constant 0.000000e+00 : f32
      %45 = vector.broadcast %cst_23 : f32 to vector<8x256xf32>
      %46 = arith.maximumf %44, %45 : vector<8x256xf32>
      %47 = vector.broadcast %18 : vector<8x1xf32> to vector<8x256xf32>
      %48 = arith.mulf %46, %47 : vector<8x256xf32>
      %c2_i32_24 = arith.constant 2 : i32
      %49 = tpu.dynamic_rotate %46 by %c2_i32_24 dim 1 : vector<8x256xf32>, i32 -> vector<8x256xf32>
      %cst_25 = arith.constant 0.000000e+00 : f32
      %50 = vector.shape_cast %20 : vector<1x256xi1> to vector<1x256xi1>
      %51 = vector.broadcast %50 : vector<1x256xi1> to vector<8x256xi1>
      %52 = vector.broadcast %cst_25 : f32 to vector<8x256xf32>
      %53 = arith.select %51, %49, %52 : vector<8x256xi1>, vector<8x256xf32>
      %54 = vector.broadcast %21 : vector<8x1xf32> to vector<8x256xf32>
      %55 = arith.mulf %53, %54 : vector<8x256xf32>
      %56 = arith.addf %48, %55 : vector<8x256xf32>
      %c1_i32_26 = arith.constant 1 : i32
      %57 = tpu.dynamic_rotate %46 by %c1_i32_26 dim 1 : vector<8x256xf32>, i32 -> vector<8x256xf32>
      %cst_27 = arith.constant 0.000000e+00 : f32
      %58 = vector.shape_cast %23 : vector<1x256xi1> to vector<1x256xi1>
      %59 = vector.broadcast %58 : vector<1x256xi1> to vector<8x256xi1>
      %60 = vector.broadcast %cst_27 : f32 to vector<8x256xf32>
      %61 = arith.select %59, %57, %60 : vector<8x256xi1>, vector<8x256xf32>
      %62 = vector.broadcast %24 : vector<8x1xf32> to vector<8x256xf32>
      %63 = arith.mulf %61, %62 : vector<8x256xf32>
      %64 = arith.addf %56, %63 : vector<8x256xf32>
      %c255_i32 = arith.constant 255 : i32
      %65 = tpu.dynamic_rotate %46 by %c255_i32 dim 1 : vector<8x256xf32>, i32 -> vector<8x256xf32>
      %cst_28 = arith.constant 0.000000e+00 : f32
      %66 = vector.shape_cast %26 : vector<1x256xi1> to vector<1x256xi1>
      %67 = vector.broadcast %66 : vector<1x256xi1> to vector<8x256xi1>
      %68 = vector.broadcast %cst_28 : f32 to vector<8x256xf32>
      %69 = arith.select %67, %65, %68 : vector<8x256xi1>, vector<8x256xf32>
      %70 = vector.broadcast %27 : vector<8x1xf32> to vector<8x256xf32>
      %71 = arith.mulf %69, %70 : vector<8x256xf32>
      %72 = arith.addf %64, %71 : vector<8x256xf32>
      %c254_i32 = arith.constant 254 : i32
      %73 = tpu.dynamic_rotate %46 by %c254_i32 dim 1 : vector<8x256xf32>, i32 -> vector<8x256xf32>
      %cst_29 = arith.constant 0.000000e+00 : f32
      %74 = vector.shape_cast %29 : vector<1x256xi1> to vector<1x256xi1>
      %75 = vector.broadcast %74 : vector<1x256xi1> to vector<8x256xi1>
      %76 = vector.broadcast %cst_29 : f32 to vector<8x256xf32>
      %77 = arith.select %75, %73, %76 : vector<8x256xi1>, vector<8x256xf32>
      %78 = vector.broadcast %30 : vector<8x1xf32> to vector<8x256xf32>
      %79 = arith.mulf %77, %78 : vector<8x256xf32>
      %80 = arith.addf %72, %79 : vector<8x256xf32>
      %81 = vector.broadcast %34 : vector<8x1xf32> to vector<8x256xf32>
      %82 = arith.addf %80, %81 : vector<8x256xf32>
      %cst_30 = arith.constant 0.000000e+00 : f32
      %83 = vector.broadcast %cst_30 : f32 to vector<8x256xf32>
      %84 = arith.maximumf %82, %83 : vector<8x256xf32>
      %cst_31 = arith.constant dense<0.000000e+00> : vector<4x256xf32>
      %85 = tpu.matmul %32, %84, %cst_31 {dimension_numbers = #tpu.dot_dimension_numbers<[1], [0], [0], [1], [0, 0, 1, 1], [], []>} : vector<4x8xf32>, vector<8x256xf32>, vector<4x256xf32> -> vector<4x256xf32>
      %86 = vector.broadcast %35 : vector<4x1xf32> to vector<4x256xf32>
      %87 = arith.addf %85, %86 : vector<4x256xf32>
      %88 = arith.addf %87, %41 : vector<4x256xf32>
      %89 = arith.index_cast %38 : i32 to index
      %c0_32 = arith.constant 0 : index
      %c0_33 = arith.constant 0 : index
      %90 = vector.load %arg9[%89, %c0_32, %c0_33] : memref<2x4x256xf32, #tpu.memory_space<vmem>>, vector<1x4x256xf32>
      %91 = vector.shape_cast %90 : vector<1x4x256xf32> to vector<4x256xf32>
      %92 = vector.shape_cast %88 : vector<4x256xf32> to vector<1x4x256xf32>
      tpu.vector_store %arg9[%89, %c0_32, %c0_33], %92 {strides = array<i32>} : memref<2x4x256xf32, #tpu.memory_space<vmem>>, vector<1x4x256xf32>,
    }
    %c2_i32_18 = arith.constant 2 : i32
    return
  }
  func.func @transform_0(%arg0: i32, %arg1: i32) -> (i32, i32, i32) {
    %c0_i32 = arith.constant 0 : i32
    %c0_i32_0 = arith.constant 0 : i32
    return %arg0, %c0_i32, %arg1 : i32, i32, i32
  }
  func.func @transform_1(%arg0: i32, %arg1: i32) -> (i32, i32) {
    %c0_i32 = arith.constant 0 : i32
    %c0_i32_0 = arith.constant 0 : i32
    %c0_i32_1 = arith.constant 0 : i32
    return %c0_i32, %c0_i32_0 : i32, i32
  }
  func.func @transform_2(%arg0: i32, %arg1: i32) -> (i32, i32) {
    %c0_i32 = arith.constant 0 : i32
    %c0_i32_0 = arith.constant 0 : i32
    %c0_i32_1 = arith.constant 0 : i32
    return %c0_i32, %c0_i32_0 : i32, i32
  }
  func.func @transform_3(%arg0: i32, %arg1: i32) -> (i32, i32) {
    %c0_i32 = arith.constant 0 : i32
    %c0_i32_0 = arith.constant 0 : i32
    %c0_i32_1 = arith.constant 0 : i32
    return %c0_i32, %c0_i32_0 : i32, i32
  }
  func.func @transform_4(%arg0: i32, %arg1: i32) -> (i32, i32) {
    %c0_i32 = arith.constant 0 : i32
    %c0_i32_0 = arith.constant 0 : i32
    %c0_i32_1 = arith.constant 0 : i32
    return %c0_i32, %c0_i32_0 : i32, i32
  }
  func.func @transform_5(%arg0: i32, %arg1: i32) -> (i32, i32) {
    %c0_i32 = arith.constant 0 : i32
    %c0_i32_0 = arith.constant 0 : i32
    %c0_i32_1 = arith.constant 0 : i32
    return %c0_i32, %c0_i32_0 : i32, i32
  }
  func.func @transform_6(%arg0: i32, %arg1: i32) -> (i32, i32) {
    %c0_i32 = arith.constant 0 : i32
    %c0_i32_0 = arith.constant 0 : i32
    %c0_i32_1 = arith.constant 0 : i32
    return %c0_i32, %c0_i32_0 : i32, i32
  }
  func.func @transform_7(%arg0: i32, %arg1: i32) -> (i32, i32, i32) {
    %c0_i32 = arith.constant 0 : i32
    %c0_i32_0 = arith.constant 0 : i32
    return %arg0, %c0_i32, %arg1 : i32, i32, i32
  }
}

</mosaic_0001>

<llo_original>
// kernel: tpu_custom_call.1
$region0: #{tpu_custom_call.1}
  #allocation0 [shape = 'u32[]', space=smem, size = 0x4, offset = 0x4, fixed_abs, tag = 'smem constant byte address 0x4 - core index']
  #allocation1 [shape = 'u32[144,128]{1,0:T(1,128)}', space=vmem, size = 0x12000, scoped, tag = 'internal scratch']
  %s0 = inlined_call_operand.vmem [shape: f32[2,4,256], index: 0, kind: input, shape index: {}]
  %s1 = inlined_call_operand.vmem [shape: f32[8,4], index: 1, kind: input, shape index: {}]
  %s2 = inlined_call_operand.vmem [shape: f32[8,1], index: 2, kind: input, shape index: {}]
  %s3 = inlined_call_operand.vmem [shape: f32[8,5], index: 3, kind: input, shape index: {}]
  %s4 = inlined_call_operand.vmem [shape: f32[8,1], index: 4, kind: input, shape index: {}]
  %s5 = inlined_call_operand.vmem [shape: f32[4,8], index: 5, kind: input, shape index: {}]
  %s6 = inlined_call_operand.vmem [shape: f32[4,1], index: 6, kind: input, shape index: {}]
  %s7 = inlined_call_operand.hbm [shape: f32[2,4,256], index: 7, kind: output, shape index: {}]
  %s8 = sld [smem:[#allocation0]]
  $region45: #{tpu_custom_call.1} parent=0
    _
  %s10 = ssub.s32 1, %s8
  %s11 = scalar_select 0, %s10, %s8
  $region1: #{tpu_custom_call.1} parent=0
    #allocation2 [shape = 'u8[8192]{0}', space=vmem, size = 0x2000, scoped, tag = 'output window, operand 0, single buffered']
    #allocation3 [shape = 's32[1]{0}', space=sflag, size = 0x4, scoped, tag = 'scoped memory for tpu_custom_call.1']
    %12 = vsyncpa [#allocation3], 0
    // Predicated region
    $region2: #{tpu_custom_call.1} parent=1 // pred_check
      _
    $region3: #{tpu_custom_call.1} parent=1 // pred_check_branch
      %14 = sbr.rel (0) target = $region5
    $region4: #{tpu_custom_call.1} parent=1 // pred_region
      _
    $region5: #{tpu_custom_call.1} parent=1 // pred_fallthru
      _
    // Predicated region
    $region6: #{tpu_custom_call.1} parent=1 // pred_check
      _
    $region7: #{tpu_custom_call.1} parent=1 // pred_check_branch
      %16 = sbr.rel (0) target = $region9
    $region8: #{tpu_custom_call.1} parent=1 // pred_region
      _
    $region9: #{tpu_custom_call.1} parent=1 // pred_fallthru
      _
    // Predicated region
    $region10: #{tpu_custom_call.1} parent=1 // pred_check
      _
    $region11: #{tpu_custom_call.1} parent=1 // pred_check_branch
      %18 = sbr.rel (0) target = $region13
    $region12: #{tpu_custom_call.1} parent=1 // pred_region
      _
    $region13: #{tpu_custom_call.1} parent=1 // pred_fallthru
      _
    // Predicated region
    $region14: #{tpu_custom_call.1} parent=1 // pred_check
      _
    $region15: #{tpu_custom_call.1} parent=1 // pred_check_branch
      %20 = sbr.rel (0) target = $region17
    $region16: #{tpu_custom_call.1} parent=1 // pred_region
      _
    $region17: #{tpu_custom_call.1} parent=1 // pred_fallthru
      _
    // Predicated region
    $region18: #{tpu_custom_call.1} parent=1 // pred_check
      _
    $region19: #{tpu_custom_call.1} parent=1 // pred_check_branch
      %22 = sbr.rel (0) target = $region21
    $region20: #{tpu_custom_call.1} parent=1 // pred_region
      _
    $region21: #{tpu_custom_call.1} parent=1 // pred_fallthru
      _
    // Predicated region
    $region22: #{tpu_custom_call.1} parent=1 // pred_check
      _
    $region23: #{tpu_custom_call.1} parent=1 // pred_check_branch
      %24 = sbr.rel (0) target = $region25
    $region24: #{tpu_custom_call.1} parent=1 // pred_region
      _
    $region25: #{tpu_custom_call.1} parent=1 // pred_fallthru
      _
    // Predicated region
    $region26: #{tpu_custom_call.1} parent=1 // pred_check
      _
    $region27: #{tpu_custom_call.1} parent=1 // pred_check_branch
      %26 = sbr.rel (0) target = $region29
    $region28: #{tpu_custom_call.1} parent=1 // pred_region
      _
    $region29: #{tpu_custom_call.1} parent=1 // pred_fallthru
      _
    %v27 = vlaneseq
    %v28 = vand.u32 %v27, 127
    %v29 = vadd.s32 %v28, 128
    %vm30 = vcmp.lt.s32.totalorder %v28, 0
    %v31 = vsub.s32 0, %v28
    %v32 = vsel %vm30, %v31, %v28
    %v33 = vshrl.u32 %v32, 4
    %v34 = vand.u32 %v32, 15
    %v35 = vsub.s32 0, %v34
    %v36 = vsel %vm30, %v35, %v34
    %vm37 = vcmp.lt.s32.totalorder %v29, 0
    %v38 = vsub.s32 0, %v29
    %v39 = vsel %vm37, %v38, %v29
    %v40 = vshrl.u32 %v39, 4
    %v41 = vand.u32 %v39, 15
    %v42 = vsub.s32 0, %v41
    %v43 = vsel %vm37, %v42, %v41
    %vm44 = vcmp.ne.s32.totalorder %v36, 0
    %vm45 = vcmp.ne.s32.totalorder %v43, 0
    %vm46 = vcmp.lt.s32.totalorder %v36, 0
    %vm47 = vcmp.lt.s32.totalorder %v43, 0
    %vm48 = vmand %vm46, %vm44
    %vm49 = vmand %vm47, %vm45
    %v50 = vadd.s32 %v36, 16
    %v51 = vadd.s32 %v43, 16
    %v52 = vsel %vm48, %v50, %v36
    %v53 = vsel %vm49, %v51, %v43
    %v54 = vld [vmem:[%s3] sm:$0xff]
    %vm55 = vcmp.ge.s32.totalorder %v52, 2
    %vm56 = vcmp.ge.s32.totalorder %v53, 2
    %vm57 = vcmp.ge.s32.totalorder %v52, 1
    %vm58 = vcmp.ge.s32.totalorder %v53, 1
    %vm59 = vcmp.lt.s32.totalorder %v52, 15
    %vm60 = vcmp.lt.s32.totalorder %v53, 15
    %vm61 = vcmp.lt.s32.totalorder %v52, 14
    %vm62 = vcmp.lt.s32.totalorder %v53, 14
    %v63 = vld [vmem:[%s1] sm:$0xff]
    %v64 = vld [vmem:[%s5] sm:$0xf]
    %v65 = vld [vmem:[%s2] sm:$0xff]
    %v66 = vld [vmem:[%s4] sm:$0xff]
    %v67 = vld [vmem:[%s6] sm:$0xf]
    loop: start=0, step=1, limit=2
    $region30: #{tpu_custom_call.1} parent=1 // loop_pre_header
      _
    $region31: #{tpu_custom_call.1} parent=1 // loop_header
      %s69 = sphi 0, %s73
      %p70 = scmp.ge.s32.totalorder %s69, 2
    $region32: #{tpu_custom_call.1} parent=1 // loop_header_branch
      %72 = sbr.rel (%p70) target = $region36
    $region33: #{tpu_custom_call.1} parent=1 // loop_body
      %s74 = smul.u32 %s69, 2
      %s75 = smul.addr %s74, 4
      %s76 = scalar_lea.vmem %s0, %s75
      %v77 = vld [vmem:[%s76] sm:$0xff]
      %79 = vset.pattern.permute.xlu0 0
      %80 = vperm.xlu0 %79, %v65
      %v81 = vpop.permute.xlu0 %80
      %v84 = vcombine.high %v77, %v77
      %vm85 = vcmask 31744
      %v87 = vsel %vm85, %v63, 0
      %vm89 = vcmask 1043456
      %v90 = vsel %vm89, %v77, 0
      %v92 = vsel %vm89, %v84, 0
      %94 = vmatprep.subr.mxu0 0.0
      %95 = vmatpush1.msra.mxu0 0.0
      %96 = vmatprep.subr.mxu0 0.0
      %97 = vmatpush1.msra.mxu0 0.0
      %98 = vmatprep.subr.mxu0 0.0
      %99 = vmatpush1.msra.mxu0 0.0
      %100 = vmatprep.subr.mxu0 0.0
      %101 = vmatpush1.msra.mxu0 0.0
      %102 = vmatprep.subr.mxu0 0.0
      %103 = vmatpush1.msra.mxu0 0.0
      %104 = vmatprep.subr.mxu0 0.0
      %105 = vmatpush1.msra.mxu0 0.0
      %106 = vmatprep.subr.mxu0 0.0
      %107 = vmatpush1.msra.mxu0 0.0
      %108 = vmatprep.subr.mxu0 0.0
      %109 = vmatpush1.msra.mxu0 0.0
      %110 = vmatprep.subr.mxu0 0.0
      %111 = vmatpush1.msra.mxu0 0.0
      %112 = vmatprep.subr.mxu0 0.0
      %113 = vmatpush1.msra.mxu0 0.0
      %114 = vmatprep.subr.mxu0 0.0
      %115 = vmatpush1.msra.mxu0 0.0
      %116 = vmatprep.subr.mxu0 0.0
      %117 = vmatpush1.msra.mxu0 0.0
      %118 = vmatprep.subr.mxu0 0.0
      %119 = vmatpush1.msra.mxu0 0.0
      %120 = vmatprep.subr.mxu0 0.0
      %121 = vmatpush1.msra.mxu0 0.0
      %122 = vmatprep.subr.mxu0 0.0
      %123 = vmatpush1.msra.mxu0 0.0
      %124 = vmatprep.subr.mxu0 %v92
      %125 = vmatpush1.msra.mxu0 %v90
      %126 = vmatprep.subr.mxu0 0.0
      %127 = vmatpush2.msra.mxu0 0.0
      %128 = vmatprep.subr.mxu0 0.0
      %129 = vmatpush2.msra.mxu0 0.0
      %130 = vmatprep.subr.mxu0 0.0
      %131 = vmatpush2.msra.mxu0 0.0
      %132 = vmatprep.subr.mxu0 0.0
      %133 = vmatpush2.msra.mxu0 0.0
      %134 = vmatprep.subr.mxu0 0.0
      %135 = vmatpush2.msra.mxu0 0.0
      %136 = vmatprep.subr.mxu0 0.0
      %137 = vmatpush2.msra.mxu0 0.0
      %138 = vmatprep.subr.mxu0 0.0
      %139 = vmatpush2.msra.mxu0 0.0
      %140 = vmatprep.subr.mxu0 0.0
      %141 = vmatpush2.msra.mxu0 0.0
      %142 = vmatprep.subr.mxu0 0.0
      %143 = vmatpush2.msra.mxu0 0.0
      %144 = vmatprep.subr.mxu0 0.0
      %145 = vmatpush2.msra.mxu0 0.0
      %146 = vmatprep.subr.mxu0 0.0
      %147 = vmatpush2.msra.mxu0 0.0
      %148 = vmatprep.subr.mxu0 0.0
      %149 = vmatpush2.msra.mxu0 0.0
      %150 = vmatprep.subr.mxu0 0.0
      %151 = vmatpush2.msra.mxu0 0.0
      %152 = vmatprep.subr.mxu0 0.0
      %153 = vmatpush2.msra.mxu0 0.0
      %154 = vmatprep.subr.mxu0 0.0
      %155 = vmatpush2.msra.mxu0 0.0
      %156 = vmatprep.subr.mxu0 0.0
      %157 = vmatpush2.msra.mxu0 0.0
      %158 = vmatprep.mubr.f32.mxu0 0.0
      %159 = vmatmul.mubr.f32.gmra.mxu0 %v87
      %v160 = vpop.f32.mrf.mxu0
      %v161 = vadd.f32 %v81, %v160
      %v162 = vpop.f32.mrf.mxu0
      %v163 = vadd.f32 %v81, %v162
      %164 = vdwg.mxu0
      %v165 = vmax.f32 %v161, 0.0
      %v166 = vmax.f32 %v163, 0.0
      %168 = vset.pattern.permute.xlu0 2
      %169 = vperm.xlu0 %168, %v54
      %v170 = vpop.permute.xlu0 %169
      %v172 = vmul.f32 %v165, %v170
      %v173 = vmul.f32 %v166, %v170
      %174 = vrot.lane.b32.xlu0 %v165, 2
      %v175 = vpop.permute.xlu0 %174
      %176 = vrot.lane.b32.xlu0 %v166, 2
      %v177 = vpop.permute.xlu0 %176
      %vm178 = vcmp.lt.s32.totalorder %v28, 2
      %v179 = vsel %vm178, %v175, %v177
      %v180 = vsel %vm178, %v177, %v175
      %v181 = vsel %vm55, 1, 0
      %v182 = vsel %vm56, 1, 0
      %vm183 = vcmp.eq.s32.totalorder %v181, 1
      %vm184 = vcmp.eq.s32.totalorder %v182, 1
      %v185 = vsel %vm183, %v180, 0.0
      %v186 = vsel %vm184, %v179, 0.0
      %187 = vset.pattern.permute.xlu0 0
      %188 = vperm.xlu0 %187, %v54
      %v189 = vpop.permute.xlu0 %188
      %v191 = vmul.f32 %v185, %v189
      %v192 = vmul.f32 %v186, %v189
      %v193 = vadd.f32 %v172, %v191
      %v194 = vadd.f32 %v173, %v192
      %195 = vrot.lane.b32.xlu0 %v165, 1
      %v196 = vpop.permute.xlu0 %195
      %197 = vrot.lane.b32.xlu0 %v166, 1
      %v198 = vpop.permute.xlu0 %197
      %vm199 = vcmp.lt.s32.totalorder %v28, 1
      %v200 = vsel %vm199, %v196, %v198
      %v201 = vsel %vm199, %v198, %v196
      %v202 = vsel %vm57, 1, 0
      %v203 = vsel %vm58, 1, 0
      %vm204 = vcmp.eq.s32.totalorder %v202, 1
      %vm205 = vcmp.eq.s32.totalorder %v203, 1
      %v206 = vsel %vm204, %v201, 0.0
      %v207 = vsel %vm205, %v200, 0.0
      %208 = vset.pattern.permute.xlu0 1
      %209 = vperm.xlu0 %208, %v54
      %v210 = vpop.permute.xlu0 %209
      %v212 = vmul.f32 %v206, %v210
      %v213 = vmul.f32 %v207, %v210
      %v214 = vadd.f32 %v193, %v212
      %v215 = vadd.f32 %v194, %v213
      %216 = vrot.lane.b32.xlu0 %v165, 127
      %v217 = vpop.permute.xlu0 %216
      %218 = vrot.lane.b32.xlu0 %v166, 127
      %v219 = vpop.permute.xlu0 %218
      %vm220 = vcmp.lt.s32.totalorder %v28, 127
      %v221 = vsel %vm220, %v217, %v219
      %v222 = vsel %vm220, %v219, %v217
      %v223 = vsel %vm59, 1, 0
      %v224 = vsel %vm60, 1, 0
      %vm225 = vcmp.eq.s32.totalorder %v223, 1
      %vm226 = vcmp.eq.s32.totalorder %v224, 1
      %v227 = vsel %vm225, %v221, 0.0
      %v228 = vsel %vm226, %v222, 0.0
      %229 = vset.pattern.permute.xlu0 3
      %230 = vperm.xlu0 %229, %v54
      %v231 = vpop.permute.xlu0 %230
      %v233 = vmul.f32 %v227, %v231
      %v234 = vmul.f32 %v228, %v231
      %v235 = vadd.f32 %v214, %v233
      %v236 = vadd.f32 %v215, %v234
      %237 = vrot.lane.b32.xlu0 %v165, 126
      %v238 = vpop.permute.xlu0 %237
      %239 = vrot.lane.b32.xlu0 %v166, 126
      %v240 = vpop.permute.xlu0 %239
      %vm241 = vcmp.lt.s32.totalorder %v28, 126
      %v242 = vsel %vm241, %v238, %v240
      %v243 = vsel %vm241, %v240, %v238
      %v244 = vsel %vm61, 1, 0
      %v245 = vsel %vm62, 1, 0
      %vm246 = vcmp.eq.s32.totalorder %v244, 1
      %vm247 = vcmp.eq.s32.totalorder %v245, 1
      %v248 = vsel %vm246, %v242, 0.0
      %v249 = vsel %vm247, %v243, 0.0
      %250 = vset.pattern.permute.xlu0 4
      %251 = vperm.xlu0 %250, %v54
      %v252 = vpop.permute.xlu0 %251
      %v254 = vmul.f32 %v248, %v252
      %v255 = vmul.f32 %v249, %v252
      %v256 = vadd.f32 %v235, %v254
      %v257 = vadd.f32 %v236, %v255
      %259 = vset.pattern.permute.xlu0 0
      %260 = vperm.xlu0 %259, %v66
      %v261 = vpop.permute.xlu0 %260
      %v263 = vadd.f32 %v256, %v261
      %v264 = vadd.f32 %v257, %v261
      %v265 = vmax.f32 %v263, 0.0
      %v266 = vmax.f32 %v264, 0.0
      %268 = vset.pattern.permute.xlu0 0
      %269 = vperm.xlu0 %268, %v67
      %v270 = vpop.permute.xlu0 %269
      %vm272 = vcmask 64512
      %v274 = vsel %vm272, %v64, 0
      %276 = vmatprep.subr.mxu0 0.0
      %277 = vmatpush1.msra.mxu0 0.0
      %278 = vmatprep.subr.mxu0 0.0
      %279 = vmatpush1.msra.mxu0 0.0
      %280 = vmatprep.subr.mxu0 0.0
      %281 = vmatpush1.msra.mxu0 0.0
      %282 = vmatprep.subr.mxu0 0.0
      %283 = vmatpush1.msra.mxu0 0.0
      %284 = vmatprep.subr.mxu0 0.0
      %285 = vmatpush1.msra.mxu0 0.0
      %286 = vmatprep.subr.mxu0 0.0
      %287 = vmatpush1.msra.mxu0 0.0
      %288 = vmatprep.subr.mxu0 0.0
      %289 = vmatpush1.msra.mxu0 0.0
      %290 = vmatprep.subr.mxu0 0.0
      %291 = vmatpush1.msra.mxu0 0.0
      %292 = vmatprep.subr.mxu0 0.0
      %293 = vmatpush1.msra.mxu0 0.0
      %294 = vmatprep.subr.mxu0 0.0
      %295 = vmatpush1.msra.mxu0 0.0
      %296 = vmatprep.subr.mxu0 0.0
      %297 = vmatpush1.msra.mxu0 0.0
      %298 = vmatprep.subr.mxu0 0.0
      %299 = vmatpush1.msra.mxu0 0.0
      %300 = vmatprep.subr.mxu0 0.0
      %301 = vmatpush1.msra.mxu0 0.0
      %302 = vmatprep.subr.mxu0 0.0
      %303 = vmatpush1.msra.mxu0 0.0
      %304 = vmatprep.subr.mxu0 0.0
      %305 = vmatpush1.msra.mxu0 0.0
      %306 = vmatprep.subr.mxu0 %v266
      %307 = vmatpush1.msra.mxu0 %v265
      %308 = vmatprep.subr.mxu0 0.0
      %309 = vmatpush2.msra.mxu0 0.0
      %310 = vmatprep.subr.mxu0 0.0
      %311 = vmatpush2.msra.mxu0 0.0
      %312 = vmatprep.subr.mxu0 0.0
      %313 = vmatpush2.msra.mxu0 0.0
      %314 = vmatprep.subr.mxu0 0.0
      %315 = vmatpush2.msra.mxu0 0.0
      %316 = vmatprep.subr.mxu0 0.0
      %317 = vmatpush2.msra.mxu0 0.0
      %318 = vmatprep.subr.mxu0 0.0
      %319 = vmatpush2.msra.mxu0 0.0
      %320 = vmatprep.subr.mxu0 0.0
      %321 = vmatpush2.msra.mxu0 0.0
      %322 = vmatprep.subr.mxu0 0.0
      %323 = vmatpush2.msra.mxu0 0.0
      %324 = vmatprep.subr.mxu0 0.0
      %325 = vmatpush2.msra.mxu0 0.0
      %326 = vmatprep.subr.mxu0 0.0
      %327 = vmatpush2.msra.mxu0 0.0
      %328 = vmatprep.subr.mxu0 0.0
      %329 = vmatpush2.msra.mxu0 0.0
      %330 = vmatprep.subr.mxu0 0.0
      %331 = vmatpush2.msra.mxu0 0.0
      %332 = vmatprep.subr.mxu0 0.0
      %333 = vmatpush2.msra.mxu0 0.0
      %334 = vmatprep.subr.mxu0 0.0
      %335 = vmatpush2.msra.mxu0 0.0
      %336 = vmatprep.subr.mxu0 0.0
      %337 = vmatpush2.msra.mxu0 0.0
      %338 = vmatprep.subr.mxu0 0.0
      %339 = vmatpush2.msra.mxu0 0.0
      %340 = vmatprep.mubr.f32.mxu0 0.0
      %341 = vmatmul.mubr.f32.gmra.mxu0 %v274
      %v342 = vpop.f32.mrf.mxu0
      %v343 = vadd.f32 %v270, %v342
      %v344 = vpop.f32.mrf.mxu0
      %v345 = vadd.f32 %v270, %v344
      %346 = vdwg.mxu0
      %v348 = vadd.f32 %v343, %v77
      %v349 = vadd.f32 %v345, %v84
      %v352 = vcombine.low %v348, %v349
      %s354 = smul.addr %s74, 4
      %s355 = scalar_lea.vmem [#allocation2], %s354
      %356 = vst [vmem:[%s355] sm:$0xff] %v352
    $region34: #{tpu_custom_call.1} parent=1 // loop_footer
      %s73 = sadd.s32 1, %s69
    $region35: #{tpu_custom_call.1} parent=1 // loop_footer_branch
      %68 = sbr.rel target = $region31
    $region36: #{tpu_custom_call.1} parent=1 // loop_exit
      _
    // Predicated region
    $region37: #{tpu_custom_call.1} parent=1 // pred_check
      _
    $region38: #{tpu_custom_call.1} parent=1 // pred_check_branch
      %358 = sbr.rel (0) target = $region40
    $region39: #{tpu_custom_call.1} parent=1 // pred_region
      %s360 = ssub.s32 256, 256
      %361 = vsyncadd [#allocation3], %s360
      %s362 = sshll.u32 [#allocation2], 4
      %s363 = int_to_ptr.vmem [resolvable:$true] %s362
      %368 = dma.vmem_to_hbm [thread:$0]  %s363, 256, %s7, [#allocation3], 128, 128, 8
    $region40: #{tpu_custom_call.1} parent=1 // pred_fallthru
      _
    // Predicated region
    $region41: #{tpu_custom_call.1} parent=1 // pred_check
      _
    $region42: #{tpu_custom_call.1} parent=1 // pred_check_branch
      %370 = sbr.rel (0) target = $region44
    $region43: #{tpu_custom_call.1} parent=1 // pred_region
      %371 = dma.done [#allocation3], 256
    $region44: #{tpu_custom_call.1} parent=1 // pred_fallthru
      _
    %372 = vsyncpa [#allocation3], 1

</llo_original>
